<compile_context>
chip_gen: v7x
topology: tpu7x:2x2x1
jax: 0.10.0
libtpu: 0.0.40
codegen_flags: <defaults>
</compile_context>

<pallas_src>
import functools

import jax
import jax.numpy as jnp
from jax import lax
from jax.experimental import pallas as pl
from jax.experimental.pallas import tpu as pltpu


def _round_up(x, m):
    return ((x + m - 1) // m) * m


def _vmem_budget_bytes():
    """Generation-aware VMEM limit: ~48 MiB on v7x (64 MiB physical),
    ~96 MiB on v5e/v6e (128 MiB physical)."""
    try:
        info = pltpu.get_tpu_info()
        cap = int(getattr(info, "vmem_capacity_bytes", 64 * 1024 * 1024))
    except Exception:
        cap = 64 * 1024 * 1024  # conservative fallback (v7x-sized VMEM)
    return min((cap * 3) // 4, 96 * 1024 * 1024)


def _num_tensorcores():
    """Best-effort detection of 2-TensorCore parts (megacore / v7x)."""
    try:
        kind = jax.devices()[0].device_kind.lower()
        return 2 if any(t in kind for t in ("v4", "v5p", "v7")) else 1
    except Exception:
        return 1


def _linear_kernel_single(has_bias, *refs):
    """grid = (n, b): full-D contraction, no accumulator, bias fused in store."""
    if has_bias:
        x_ref, w_ref, b_ref, o_ref = refs
    else:
        x_ref, w_ref, o_ref = refs
        b_ref = None
    # Contract K of x against K of w; weight kept in PyTorch (N, D) layout.
    # TODO(synk): if pl.lower_as_mlir shows a per-tile vxpose for this minor-dim
    # contraction, pre-transpose the weight to (D, N) once at layer init and use
    # the standard (K, N) RHS contraction instead.
    acc = lax.dot_general(
        x_ref[...], w_ref[...],
        dimension_numbers=(((1,), (1,)), ((), ())),
        preferred_element_type=jnp.float32,
    )
    if b_ref is not None:
        acc = acc + b_ref[...].astype(jnp.float32)
    o_ref[...] = acc.astype(o_ref.dtype)


def _linear_kernel_ktiled(has_bias, *refs):
    """grid = (n, b, k): K-tiled reduction with an f32 VMEM accumulator."""
    if has_bias:
        x_ref, w_ref, b_ref, o_ref, acc_ref = refs
    else:
        x_ref, w_ref, o_ref, acc_ref = refs
        b_ref = None
    k = pl.program_id(2)

    @pl.when(k == 0)
    def _():
        acc_ref[...] = jnp.zeros_like(acc_ref)

    acc_ref[...] += lax.dot_general(
        x_ref[...], w_ref[...],
        dimension_numbers=(((1,), (1,)), ((), ())),
        preferred_element_type=jnp.float32,
    )

    @pl.when(k == pl.num_programs(2) - 1)
    def _():
        out = acc_ref[...]
        if b_ref is not None:
            out = out + b_ref[...].astype(jnp.float32)
        o_ref[...] = out.astype(o_ref.dtype)


def linear_layer(x, weight, bias=None, *,
                 tile_b=512, tile_n=512, tile_k=2048,
                 compute_dtype=None):
    """y = x @ weight.T + bias, matching torch.nn.Linear semantics.

    x:      (B, D)
    weight: (N, D)  -- PyTorch nn.Linear layout, used as-is (no transpose copy)
    bias:   (N,) or None
    compute_dtype: e.g. jnp.bfloat16 for the low-precision operand path
                   (f32 accumulation / f32 bias add; output keeps x.dtype).
    """
    B, D = x.shape
    N, D2 = weight.shape
    assert D == D2, "weight must be (num_classes, input_dimension)"
    out_dtype = x.dtype
    has_bias = bias is not None

    if compute_dtype is not None:
        # TODO(synk): in a real layer, cast (and optionally fp8-quantize on v7x)
        # the weight once at init instead of per call.
        x = x.astype(compute_dtype)
        weight = weight.astype(compute_dtype)

    in_itemsize = jnp.dtype(x.dtype).itemsize
    out_itemsize = jnp.dtype(out_dtype).itemsize
    sublane = 8 * (4 // in_itemsize)          # 8 (f32) / 16 (bf16) / 32 (8-bit)

    budget = _vmem_budget_bytes()
    num_tc = _num_tensorcores()

    # ---- tile selection -----------------------------------------------------
    tb_full = B <= tile_b
    tb = B if tb_full else _round_up(tile_b, sublane)
    tn_full = N <= tile_n
    tn = N if tn_full else _round_up(tile_n, 128)
    tk = _round_up(min(tile_k, D), 128)
    if tk >= D:
        tk = D                                 # full-D tile => single-pass path

    def _footprint(tb_, tn_, tk_):
        k_tiled_ = tk_ < D
        in_bufs = 3 if k_tiled_ else 2         # Buffered(3) on the K-tiled path
        fp = in_bufs * (tb_ * tk_ + tn_ * tk_) * in_itemsize   # x + w tiles
        fp += 2 * tb_ * tn_ * out_itemsize                      # output tile
        fp += 2 * tn_ * 4                                       # bias tile
        if k_tiled_:
            fp += tb_ * tn_ * 4                                 # f32 accumulator
        return fp

    limit = int(budget * 0.8)                  # headroom for Mosaic scratch
    while _footprint(tb, tn, tk) > limit:
        if tk > 512:
            tk = max(512, _round_up(tk // 2, 128))
            if tk >= D:
                tk = D
        elif (not tn_full) and tn > 128:
            tn = max(128, _round_up(tn // 2, 128))
        elif (not tb_full) and tb > sublane:
            tb = max(sublane, _round_up(tb // 2, sublane))
        else:
            break

    # 2-TC parts: make sure the parallel (n, b) grid can use both cores.
    grid_n = pl.cdiv(N, tn)
    grid_b = pl.cdiv(B, tb)
    if num_tc >= 2 and grid_n * grid_b < 2:
        if N >= 256:
            tn = _round_up(pl.cdiv(N, 2), 128)
        elif B >= 2 * sublane:
            tb = _round_up(pl.cdiv(B, 2), sublane)
        grid_n = pl.cdiv(N, tn)
        grid_b = pl.cdiv(B, tb)

    k_tiled = tk < D
    if k_tiled:
        Dp = _round_up(D, tk)
        if Dp != D:
            # Zero-pad ONLY the reduction (K) dim: garbage K data would corrupt
            # the accumulation.  Ragged B / N blocks are handled by masked I/O.
            x = jnp.pad(x, ((0, 0), (0, Dp - D)))
            weight = jnp.pad(weight, ((0, 0), (0, Dp - D)))
        grid_k = Dp // tk
    else:
        grid_k = 1

    # ---- specs & call ---------------------------------------------------------
    if k_tiled:
        kernel = functools.partial(_linear_kernel_ktiled, has_bias)
        grid = (grid_n, grid_b, grid_k)
        x_spec = pl.BlockSpec((tb, tk), lambda n, b, k: (b, k),
                              pipeline_mode=pl.Buffered(3))
        w_spec = pl.BlockSpec((tn, tk), lambda n, b, k: (n, k),
                              pipeline_mode=pl.Buffered(3))
        b_spec = pl.BlockSpec((1, tn), lambda n, b, k: (0, n))
        o_spec = pl.BlockSpec((tb, tn), lambda n, b, k: (b, n))
        scratch = [pltpu.VMEM((tb, tn), jnp.float32)]
        semantics = ("parallel", "parallel", "arbitrary")
    else:
        kernel = functools.partial(_linear_kernel_single, has_bias)
        grid = (grid_n, grid_b)                # n outer: (tn, D) weight block
        x_spec = pl.BlockSpec((tb, tk), lambda n, b: (b, 0))   # stays resident
        w_spec = pl.BlockSpec((tn, tk), lambda n, b: (n, 0))   # across b sweep
        b_spec = pl.BlockSpec((1, tn), lambda n, b: (0, n))
        o_spec = pl.BlockSpec((tb, tn), lambda n, b: (b, n))
        scratch = []
        semantics = ("parallel", "parallel")

    in_specs = [x_spec, w_spec] + ([b_spec] if has_bias else [])
    operands = [x, weight] + ([bias.reshape(1, N)] if has_bias else [])

    out = pl.pallas_call(
        kernel,
        out_shape=jax.ShapeDtypeStruct((B, N), out_dtype),
        grid_spec=pltpu.PrefetchScalarGridSpec(
            num_scalar_prefetch=0,
            grid=grid,
            in_specs=in_specs,
            out_specs=o_spec,
            scratch_shapes=scratch,
        ),
        compiler_params=pltpu.CompilerParams(
            dimension_semantics=semantics,
            vmem_limit_bytes=budget,
        ),
    )(*operands)
    return out


if __name__ == "__main__":
    key = jax.random.PRNGKey(0)
    kx, kw, kb, kx2, kw2 = jax.random.split(key, 5)

    # Shapes implied by the module: batch=8, input_dimension=32, num_classes=16.
    B, D, N = 8, 32, 16
    x = jax.random.normal(kx, (B, D), dtype=jnp.float32)
    bound = 1.0 / (D ** 0.5)
    weight = jax.random.uniform(kw, (N, D), minval=-bound, maxval=bound,
                                dtype=jnp.float32)
    bias = jax.random.uniform(kb, (N,), minval=-bound, maxval=bound,
                              dtype=jnp.float32)

    y = linear_layer(x, weight, bias)
    jax.block_until_ready(y)
    y_ref = x @ weight.T + bias
    assert y.shape == (B, N)
    assert jnp.allclose(y, y_ref, atol=1e-5, rtol=1e-5)

    # No-bias variant + ragged-B tiling (grid_b = cdiv(20, 8) = 3, masked edge).
    B2, D2, N2 = 20, 96, 40
    x2 = jax.random.normal(kx2, (B2, D2), dtype=jnp.float32)
    w2 = jax.random.uniform(kw2, (N2, D2), minval=-0.1, maxval=0.1,
                            dtype=jnp.float32)
    y2 = linear_layer(x2, w2, None, tile_b=8)
    jax.block_until_ready(y2)
    assert jnp.allclose(y2, x2 @ w2.T, atol=1e-5, rtol=1e-5)

    # Optional bf16 operand path (f32 accumulation) — looser tolerance.
    y3 = linear_layer(x, weight, bias, compute_dtype=jnp.bfloat16)
    jax.block_until_ready(y3)
    assert jnp.allclose(y3, y_ref, atol=5e-2, rtol=5e-2)

    print("KERNEL_OK")
</pallas_src>

<mosaic_0001>
module attributes {stable_mosaic.version = 11 : i64} {
  func.func @_linear_kernel_single(%arg0: i32, %arg1: i32, %arg2: memref<8x32xf32, #tpu.memory_space<vmem>>, %arg3: memref<16x32xf32, #tpu.memory_space<vmem>>, %arg4: memref<1x16xf32, #tpu.memory_space<vmem>>, %arg5: memref<8x16xf32, #tpu.memory_space<vmem>>) attributes {dimension_semantics = [#tpu.dimension_semantics<parallel>, #tpu.dimension_semantics<parallel>], iteration_bounds = array<i64: 1, 1>, scalar_prefetch = 0 : i64, scratch_operands = 0 : i64, tpu.core_type = #tpu.core_type<tc>, window_params = [{transform_indices = @transform_0, window_bounds = array<i64: 8, 32>}, {transform_indices = @transform_1, window_bounds = array<i64: 16, 32>}, {transform_indices = @transform_2, window_bounds = array<i64: 1, 16>}, {transform_indices = @transform_3, window_bounds = array<i64: 8, 16>}]} {
    %c0 = arith.constant 0 : index
    %c0_0 = arith.constant 0 : index
    %0 = vector.load %arg2[%c0, %c0_0] : memref<8x32xf32, #tpu.memory_space<vmem>>, vector<8x32xf32>
    %c0_1 = arith.constant 0 : index
    %c0_2 = arith.constant 0 : index
    %1 = vector.load %arg3[%c0_1, %c0_2] : memref<16x32xf32, #tpu.memory_space<vmem>>, vector<16x32xf32>
    %cst = arith.constant dense<0.000000e+00> : vector<8x16xf32>
    %2 = tpu.matmul %0, %1, %cst {dimension_numbers = #tpu.dot_dimension_numbers<[1], [1], [0], [0], [0, 0, 1, 0], [], []>} : vector<8x32xf32>, vector<16x32xf32>, vector<8x16xf32> -> vector<8x16xf32>
    %c0_3 = arith.constant 0 : index
    %c0_4 = arith.constant 0 : index
    %3 = vector.load %arg4[%c0_3, %c0_4] : memref<1x16xf32, #tpu.memory_space<vmem>>, vector<1x16xf32>
    %4 = vector.broadcast %3 : vector<1x16xf32> to vector<8x16xf32>
    %5 = arith.addf %2, %4 : vector<8x16xf32>
    %c0_5 = arith.constant 0 : index
    %c0_6 = arith.constant 0 : index
    %6 = vector.load %arg5[%c0_5, %c0_6] : memref<8x16xf32, #tpu.memory_space<vmem>>, vector<8x16xf32>
    tpu.vector_store %arg5[%c0_5, %c0_6], %5 {strides = array<i32>} : memref<8x16xf32, #tpu.memory_space<vmem>>, vector<8x16xf32>,
    return
  }
  func.func @transform_0(%arg0: i32, %arg1: i32) -> (i32, i32) {
    %c0_i32 = arith.constant 0 : i32
    %c0_i32_0 = arith.constant 0 : i32
    return %arg1, %c0_i32 : i32, i32
  }
  func.func @transform_1(%arg0: i32, %arg1: i32) -> (i32, i32) {
    %c0_i32 = arith.constant 0 : i32
    %c0_i32_0 = arith.constant 0 : i32
    return %arg0, %c0_i32 : i32, i32
  }
  func.func @transform_2(%arg0: i32, %arg1: i32) -> (i32, i32) {
    %c0_i32 = arith.constant 0 : i32
    %c0_i32_0 = arith.constant 0 : i32
    return %c0_i32, %arg0 : i32, i32
  }
  func.func @transform_3(%arg0: i32, %arg1: i32) -> (i32, i32) {
    %c0_i32 = arith.constant 0 : i32
    return %arg1, %arg0 : i32, i32
  }
}

</mosaic_0001>

<llo_original>
// kernel: tpu_custom_call.1
$region0: #{tpu_custom_call.1}
  #allocation0 [shape = 'u32[]', space=smem, size = 0x4, offset = 0x4, fixed_abs, tag = 'smem constant byte address 0x4 - core index']
  #allocation1 [shape = 'u32[144,128]{1,0:T(1,128)}', space=vmem, size = 0x12000, scoped, tag = 'internal scratch']
  %s0 = inlined_call_operand.hbm [shape: f32[8,32], index: 0, kind: input, shape index: {}]
  %s1 = inlined_call_operand.hbm [shape: f32[16,32], index: 1, kind: input, shape index: {}]
  %s2 = inlined_call_operand.vmem [shape: f32[1,16], index: 2, kind: input, shape index: {}]
  %s3 = inlined_call_operand.hbm [shape: f32[8,16], index: 3, kind: output, shape index: {}]
  %s4 = sld [smem:[#allocation0]]
  $region30: #{tpu_custom_call.1} parent=0
    _
  %s6 = ssub.s32 1, %s4
  %s7 = scalar_select 0, %s6, %s4
  $region1: #{tpu_custom_call.1} parent=0
    #allocation2 [shape = 'u8[4096]{0}', space=vmem, size = 0x1000, scoped, tag = 'input window, operand 0, single buffered']
    #allocation3 [shape = 's32[1]{0}', space=sflag, size = 0x4, scoped, tag = 'scoped memory for tpu_custom_call.1']
    #allocation4 [shape = 's32[1]{0}', space=sflag, size = 0x4, scoped, tag = 'scoped memory for tpu_custom_call.1']
    #allocation5 [shape = 'u8[8192]{0}', space=vmem, size = 0x2000, scoped, tag = 'input window, operand 1, single buffered']
    #allocation6 [shape = 's32[1]{0}', space=sflag, size = 0x4, scoped, tag = 'scoped memory for tpu_custom_call.1']
    #allocation7 [shape = 'u8[4096]{0}', space=vmem, size = 0x1000, scoped, tag = 'output window, operand 0, single buffered']
    %8 = vsyncpa [#allocation3], 0
    %9 = vsyncpa [#allocation6], 0
    %10 = vsyncpa [#allocation4], 0
    // Predicated region
    $region2: #{tpu_custom_call.1} parent=1 // pred_check
      _
    $region3: #{tpu_custom_call.1} parent=1 // pred_check_branch
      %12 = sbr.rel (0) target = $region5
    $region4: #{tpu_custom_call.1} parent=1 // pred_region
      %s14 = ssub.s32 128, 128
      %15 = vsyncadd [#allocation3], %s14
      %s17 = sshll.u32 [#allocation2], 4
      %s18 = int_to_ptr.vmem [resolvable:$true] %s17
      %20 = dma.hbm_to_vmem [thread:$0]  %s0, 128, %s18, [#allocation3]
    $region5: #{tpu_custom_call.1} parent=1 // pred_fallthru
      _
    // Predicated region
    $region6: #{tpu_custom_call.1} parent=1 // pred_check
      _
    $region7: #{tpu_custom_call.1} parent=1 // pred_check_branch
      %22 = sbr.rel (0) target = $region9
    $region8: #{tpu_custom_call.1} parent=1 // pred_region
      %s24 = ssub.s32 256, 256
      %25 = vsyncadd [#allocation6], %s24
      %s26 = sshll.u32 [#allocation5], 4
      %s27 = int_to_ptr.vmem [resolvable:$true] %s26
      %32 = dma.hbm_to_vmem [thread:$0]  %s1, 256, %s27, [#allocation6], 128, 128, 8
    $region9: #{tpu_custom_call.1} parent=1 // pred_fallthru
      _
    // Predicated region
    $region10: #{tpu_custom_call.1} parent=1 // pred_check
      _
    $region11: #{tpu_custom_call.1} parent=1 // pred_check_branch
      %34 = sbr.rel (0) target = $region13
    $region12: #{tpu_custom_call.1} parent=1 // pred_region
      _
    $region13: #{tpu_custom_call.1} parent=1 // pred_fallthru
      _
    // Predicated region
    $region14: #{tpu_custom_call.1} parent=1 // pred_check
      _
    $region15: #{tpu_custom_call.1} parent=1 // pred_check_branch
      %36 = sbr.rel (0) target = $region17
    $region16: #{tpu_custom_call.1} parent=1 // pred_region
      %37 = dma.done [#allocation3], 128
    $region17: #{tpu_custom_call.1} parent=1 // pred_fallthru
      _
    // Predicated region
    $region18: #{tpu_custom_call.1} parent=1 // pred_check
      _
    $region19: #{tpu_custom_call.1} parent=1 // pred_check_branch
      %39 = sbr.rel (0) target = $region21
    $region20: #{tpu_custom_call.1} parent=1 // pred_region
      %40 = dma.done [#allocation6], 256
    $region21: #{tpu_custom_call.1} parent=1 // pred_fallthru
      _
    %v41 = vld [vmem:[#allocation2] sm:$0xff]
    %v42 = vld [vmem:[#allocation5] sm:$0xff]
    %v43 = vld [vmem:[#allocation5 + $0x8] sm:$0xff]
    %v44 = vld [vmem:[%s2] sm:$0x1]
    %v46 = vlaneseq
    %v47 = vshrl.u32 %v46, 7
    %v48 = vsub.s32 0, %v47
    %v49 = vrot.slane %v44, %v48
    %vm51 = vcmask 261120
    %v53 = vsel %vm51, %v41, 0
    %v56 = vsel %vm51, %v42, 0
    %v59 = vsel %vm51, %v43, 0
    %61 = vmatprep.subr.mxu0 0.0
    %62 = vmatpush1.xpose.msra.mxu0 %v56
    %63 = vmatprep.subr.mxu0 0.0
    %64 = vmatpush1.xpose.msra.mxu0 %v59
    %65 = vmatprep.subr.mxu0 0.0
    %66 = vmatpush1.xpose.msra.mxu0 0.0
    %67 = vmatprep.subr.mxu0 0.0
    %68 = vmatpush1.xpose.msra.mxu0 0.0
    %69 = vmatprep.subr.mxu0 0.0
    %70 = vmatpush1.xpose.msra.mxu0 0.0
    %71 = vmatprep.subr.mxu0 0.0
    %72 = vmatpush1.xpose.msra.mxu0 0.0
    %73 = vmatprep.subr.mxu0 0.0
    %74 = vmatpush1.xpose.msra.mxu0 0.0
    %75 = vmatprep.subr.mxu0 0.0
    %76 = vmatpush1.xpose.msra.mxu0 0.0
    %77 = vmatprep.subr.mxu0 0.0
    %78 = vmatpush1.xpose.msra.mxu0 0.0
    %79 = vmatprep.subr.mxu0 0.0
    %80 = vmatpush1.xpose.msra.mxu0 0.0
    %81 = vmatprep.subr.mxu0 0.0
    %82 = vmatpush1.xpose.msra.mxu0 0.0
    %83 = vmatprep.subr.mxu0 0.0
    %84 = vmatpush1.xpose.msra.mxu0 0.0
    %85 = vmatprep.subr.mxu0 0.0
    %86 = vmatpush1.xpose.msra.mxu0 0.0
    %87 = vmatprep.subr.mxu0 0.0
    %88 = vmatpush1.xpose.msra.mxu0 0.0
    %89 = vmatprep.subr.mxu0 0.0
    %90 = vmatpush1.xpose.msra.mxu0 0.0
    %91 = vmatprep.subr.mxu0 0.0
    %92 = vmatpush1.xpose.msra.mxu0 0.0
    %93 = vmatprep.subr.mxu0 0.0
    %94 = vmatpush1.xpose.msra.mxu0 0.0
    %95 = vmatprep.subr.mxu0 0.0
    %96 = vmatpush1.xpose.msra.mxu0 0.0
    %97 = vmatprep.subr.mxu0 0.0
    %98 = vmatpush1.xpose.msra.mxu0 0.0
    %99 = vmatprep.subr.mxu0 0.0
    %100 = vmatpush1.xpose.msra.mxu0 0.0
    %101 = vmatprep.subr.mxu0 0.0
    %102 = vmatpush1.xpose.msra.mxu0 0.0
    %103 = vmatprep.subr.mxu0 0.0
    %104 = vmatpush1.xpose.msra.mxu0 0.0
    %105 = vmatprep.subr.mxu0 0.0
    %106 = vmatpush1.xpose.msra.mxu0 0.0
    %107 = vmatprep.subr.mxu0 0.0
    %108 = vmatpush1.xpose.msra.mxu0 0.0
    %109 = vmatprep.subr.mxu0 0.0
    %110 = vmatpush1.xpose.msra.mxu0 0.0
    %111 = vmatprep.subr.mxu0 0.0
    %112 = vmatpush1.xpose.msra.mxu0 0.0
    %113 = vmatprep.subr.mxu0 0.0
    %114 = vmatpush1.xpose.msra.mxu0 0.0
    %115 = vmatprep.subr.mxu0 0.0
    %116 = vmatpush1.xpose.msra.mxu0 0.0
    %117 = vmatprep.subr.mxu0 0.0
    %118 = vmatpush1.xpose.msra.mxu0 0.0
    %119 = vmatprep.subr.mxu0 0.0
    %120 = vmatpush1.xpose.msra.mxu0 0.0
    %121 = vmatprep.subr.mxu0 0.0
    %122 = vmatpush1.xpose.msra.mxu0 0.0
    %123 = vmatprep.subr.mxu0 0.0
    %124 = vmatpush1.xpose.msra.mxu0 0.0
    %125 = vmatprep.mubr.f32.mxu0 0.0
    %126 = vmatmul.mubr.f32.gmra.mrb[0].mxu0 %v53
    %v127 = vpop.f32.mrb[0].mxu0
    %v128 = vadd.f32 %v49, %v127
    %v129 = vpop.f32.mrb[0].mxu0
    %130 = vdwg.mxu0
    %vm131 = vcmask 130048
    %132 = vst.msk [vmem:[#allocation7] sm:$0xff] %vm131, %v128
    // Predicated region
    $region22: #{tpu_custom_call.1} parent=1 // pred_check
      _
    $region23: #{tpu_custom_call.1} parent=1 // pred_check_branch
      %134 = sbr.rel (0) target = $region25
    $region24: #{tpu_custom_call.1} parent=1 // pred_region
      %s136 = ssub.s32 128, 128
      %137 = vsyncadd [#allocation4], %s136
      %s139 = sshll.u32 [#allocation7], 4
      %s140 = int_to_ptr.vmem [resolvable:$true] %s139
      %142 = dma.vmem_to_hbm [thread:$0]  %s140, 128, %s3, [#allocation4]
    $region25: #{tpu_custom_call.1} parent=1 // pred_fallthru
      _
    // Predicated region
    $region26: #{tpu_custom_call.1} parent=1 // pred_check
      _
    $region27: #{tpu_custom_call.1} parent=1 // pred_check_branch
      %144 = sbr.rel (0) target = $region29
    $region28: #{tpu_custom_call.1} parent=1 // pred_region
      %145 = dma.done [#allocation4], 128
    $region29: #{tpu_custom_call.1} parent=1 // pred_fallthru
      _
    %146 = vsyncpa [#allocation3], 1
    %147 = vsyncpa [#allocation6], 1
    %148 = vsyncpa [#allocation4], 1

</llo_original>
